<compile_context>
chip_gen: v5e
topology: v5e:2x2
jax: 0.10.0
libtpu: 0.0.40
codegen_flags: <defaults>
</compile_context>

<pallas_src>
import functools

import numpy as np
import jax
import jax.numpy as jnp
from jax.experimental import pallas as pl
from jax.experimental.pallas import tpu as pltpu


_MAX_LANE_TILE = 4096          # lane-tile cap (multiples of 128); the byte budget governs
_MAX_BATCH_TILE_MATMUL = 8     # cap for the statically unrolled per-row matmul loop
_MAX_BATCH_TILE_MEAN = 64      # global-mean kernel is fully vectorized over the block


# ----------------------------------------------------------------------------
# Pool-matrix construction (cached on host; folded to constants under jit).
# ----------------------------------------------------------------------------
@functools.lru_cache(maxsize=None)
def _pool_matrix_np(in_size: int, out_size: int, padded_in_size=None):
    """0/1 window matrix [out_size, L_pad] + f32 [out_size, 1] 1/window scales."""
    l_pad = in_size if padded_in_size is None else padded_in_size
    p = np.zeros((out_size, l_pad), dtype=np.float32)
    s = np.zeros((out_size, 1), dtype=np.float32)
    for i in range(out_size):
        st = (i * in_size) // out_size
        en = -((-(i + 1) * in_size) // out_size)          # ceil((i+1)*L/O)
        p[i, st:en] = 1.0
        s[i, 0] = 1.0 / float(en - st)
    return p, s


# ----------------------------------------------------------------------------
# Generation-aware VMEM planning.
# ----------------------------------------------------------------------------
@functools.lru_cache(maxsize=None)
def _vmem_plan():
    """(vmem_limit_bytes, block_byte_budget, two_tensorcores)."""
    try:
        cap = int(pltpu.get_tpu_info().vmem_capacity_bytes)
    except Exception:
        cap = 64 * 1024 * 1024                            # conservative (v7x-sized)
    try:
        kind = jax.devices()[0].device_kind.lower()
    except Exception:
        kind = ""
    is_v7 = "v7" in kind
    if is_v7:
        cap = min(cap, 64 * 1024 * 1024)                  # 64 MiB per TensorCore on v7x
    two_cores = is_v7 or cap <= 64 * 1024 * 1024          # v7x: 2 TCs share HBM
    vmem_limit = min(cap * 3 // 4, 100 * 1024 * 1024)     # ~48 MiB v7x / ~96 MiB v5e,v6e
    budget = int(vmem_limit * 0.85)                       # headroom for compiler temps
    return vmem_limit, budget, two_cores


@functools.lru_cache(maxsize=None)
def _plan_tiles(n, l, c, o, in_item, out_item, budget, two_cores, mean_path,
                forced_l_tile):
    """Choose (b_tile, l_tile, c_tile, split_l) so that double-buffered blocks,
    the pool matrix, the f32 accumulator and any f32 temp fit the VMEM budget."""

    def fits(bt, lt, ct):
        x_b = bt * lt * ct * in_item                       # input block
        o_b = bt * o * ct * out_item                       # output block
        p_b = o * lt * 4                                   # pool-matrix block (f32 bound)
        acc_b = bt * o * ct * 4                            # f32 accumulator / matmul result
        tmp_b = bt * lt * ct * 4 if (mean_path and in_item < 4) else 0
        return 2 * (x_b + o_b + p_b) + acc_b + tmp_b <= budget

    if forced_l_tile is not None:                          # test hook for the split path
        return 1, int(forced_l_tile), c, True

    # --- lane (channel) tile: full C first, then C-divisors, then 128-multiples ---
    cands = [c]
    top = min(_MAX_LANE_TILE, (c // 128) * 128)
    if top >= 128:
        cands += [t for t in range(top, 127, -128) if c % t == 0]
        cands += [t for t in range(top, 127, -128) if c % t != 0 and t < c]
    lane_cands = list(dict.fromkeys(cands))

    c_tile = next((t for t in lane_cands if fits(1, l, t)), None)

    if c_tile is None:
        # Even a (1, L, min_lane_tile) block busts the budget: split L onto a
        # third ("arbitrary") grid axis and accumulate in an f32 VMEM scratch.
        c_tile = lane_cands[-1]
        max_lt = max(128, (l // 128) * 128)
        while max_lt > 128 and not fits(1, max_lt, c_tile):
            max_lt -= 128
        # Prefer an L-tile that divides L (avoids zero-padding the input).
        l_tile = next((t for t in range(max_lt, 127, -128) if l % t == 0), None)
        if l_tile is None or l_tile * 4 < max_lt:
            l_tile = max_lt                                # wrapper zero-pads L instead
        return 1, l_tile, c_tile, True

    # --- batch tile: as many rows as fit the budget (no divisibility required) ---
    max_bt = min(n, _MAX_BATCH_TILE_MEAN if mean_path else _MAX_BATCH_TILE_MATMUL)
    b_tile = next((bt for bt in range(max_bt, 0, -1) if fits(bt, l, c_tile)), 1)

    # --- v7x megacore: a single-step grid starves one of the two TensorCores ---
    if two_cores and pl.cdiv(n, b_tile) == 1 and pl.cdiv(c, c_tile) == 1:
        if n >= 2:
            b_tile = pl.cdiv(n, 2)
        elif c_tile > 128 and c_tile % 256 == 0:
            c_tile //= 2
    return b_tile, l, c_tile, False


# ----------------------------------------------------------------------------
# Kernels.
# ----------------------------------------------------------------------------
def _global_mean_kernel(x_ref, o_ref):
    # x: (BT, L, CT) -> o: (BT, 1, CT).  output_size == 1 fast path: VPU/XLU
    # reduction with f32 accumulation, no pool-matrix DMA and no MXU latency.
    acc = jnp.sum(x_ref[...], axis=1, keepdims=True, dtype=jnp.float32)
    o_ref[...] = (acc * (1.0 / x_ref.shape[1])).astype(o_ref.dtype)


def _pool_matmul_kernel(p_ref, s_ref, x_ref, o_ref):
    # p: (O, L) 0/1 windows; s: (O, 1) f32 1/window; x: (BT, L, CT); o: (BT, O, CT).
    # Per-row 2D matmuls (static unroll, BT <= 8): clean MXU ops; exact 0/1
    # weights accumulate in f32, the scale is applied before the downcast.
    p = p_ref[...]
    s = s_ref[...]
    for b in range(x_ref.shape[0]):
        acc = jnp.dot(p, x_ref[b], preferred_element_type=jnp.float32)
        o_ref[b] = (acc * s).astype(o_ref.dtype)


def _pool_matmul_acc_kernel(p_ref, s_ref, x_ref, o_ref, acc_ref):
    # Same as above, but the reduction axis L is split over grid axis 2 and the
    # partial products accumulate in an f32 VMEM scratch (init on k==0,
    # scale + store on the last k).
    k = pl.program_id(2)

    @pl.when(k == 0)
    def _():
        acc_ref[...] = jnp.zeros_like(acc_ref)

    p = p_ref[...]
    for b in range(x_ref.shape[0]):
        acc_ref[b] += jnp.dot(p, x_ref[b], preferred_element_type=jnp.float32)

    @pl.when(k == pl.num_programs(2) - 1)
    def _():
        o_ref[...] = (acc_ref[...] * s_ref[...]).astype(o_ref.dtype)


# ----------------------------------------------------------------------------
# Pallas wrapper: pool axis 1 of a [N, L, C] array -> [N, O, C].
# ----------------------------------------------------------------------------
def _pool_middle_axis(x3, out_size, out_dtype=None, *, force_split_l=None):
    n, l, c = x3.shape
    in_dtype = jnp.dtype(x3.dtype)
    out_dtype = jnp.dtype(in_dtype if out_dtype is None else out_dtype)
    out_size = int(out_size)

    if not jnp.issubdtype(in_dtype, jnp.floating):
        raise TypeError(f"AdaptivePool requires floating-point inputs, got {in_dtype}")

    if out_size == l:                                      # identity windows
        return x3.astype(out_dtype)

    vmem_limit, budget, two_cores = _vmem_plan()
    b_tile, l_tile, c_tile, split_l = _plan_tiles(
        n, l, c, out_size, in_dtype.itemsize, out_dtype.itemsize,
        budget, two_cores, out_size == 1, force_split_l)

    nb, nc = pl.cdiv(n, b_tile), pl.cdiv(c, c_tile)
    out_shape = jax.ShapeDtypeStruct((n, out_size, c), out_dtype)
    cost = pl.CostEstimate(
        flops=2 * n * out_size * l * c,
        transcendentals=0,
        bytes_accessed=n * c * (l * in_dtype.itemsize + out_size * out_dtype.itemsize))

    # bf16/f16 feed the MXU directly (the 0/1 matrix is exact in those dtypes);
    # everything else (f32, fp8, ...) keeps f32 weights and lets the dot promote.
    if in_dtype in (jnp.dtype(jnp.bfloat16), jnp.dtype(jnp.float16)):
        p_dtype = in_dtype
    else:
        p_dtype = jnp.dtype(jnp.float32)

    if not split_l:
        x_spec = pl.BlockSpec((b_tile, l, c_tile), lambda i, j: (i, 0, j))
        o_spec = pl.BlockSpec((b_tile, out_size, c_tile), lambda i, j: (i, 0, j))
        params = pltpu.CompilerParams(
            dimension_semantics=("parallel", "parallel"),
            vmem_limit_bytes=vmem_limit)

        if out_size == 1:
            # TODO(synk): chunked in-kernel accumulation would avoid the f32
            # upcast temp for bf16 inputs; it is accounted for in the budget.
            return pl.pallas_call(
                _global_mean_kernel, out_shape=out_shape, grid=(nb, nc),
                in_specs=[x_spec], out_specs=o_spec,
                compiler_params=params, cost_estimate=cost)(x3)

        p_np, s_np = _pool_matrix_np(l, out_size)
        p = jnp.asarray(p_np, dtype=p_dtype)
        s = jnp.asarray(s_np)                              # f32 scales
        p_spec = pl.BlockSpec((out_size, l), lambda i, j: (0, 0))
        s_spec = pl.BlockSpec((out_size, 1), lambda i, j: (0, 0))
        return pl.pallas_call(
            _pool_matmul_kernel, out_shape=out_shape, grid=(nb, nc),
            in_specs=[p_spec, s_spec, x_spec], out_specs=o_spec,
            compiler_params=params, cost_estimate=cost)(p, s, x3)

    # ---- L split: 3D grid with an f32 accumulator over the reduction axis ----
    l_pad = pl.cdiv(l, l_tile) * l_tile
    nk = l_pad // l_tile
    xk = x3 if l_pad == l else jnp.pad(x3, ((0, 0), (0, l_pad - l), (0, 0)))
    p_np, s_np = _pool_matrix_np(l, out_size, l_pad)       # zero cols past the real L
    p = jnp.asarray(p_np, dtype=p_dtype)
    s = jnp.asarray(s_np)

    p_spec = pl.BlockSpec((out_size, l_tile), lambda i, j, k: (0, k))
    s_spec = pl.BlockSpec((out_size, 1), lambda i, j, k: (0, 0))
    x_spec = pl.BlockSpec((b_tile, l_tile, c_tile), lambda i, j, k: (i, k, j))
    o_spec = pl.BlockSpec((b_tile, out_size, c_tile), lambda i, j, k: (i, 0, j))
    params = pltpu.CompilerParams(
        dimension_semantics=("parallel", "parallel", "arbitrary"),
        vmem_limit_bytes=vmem_limit)
    return pl.pallas_call(
        _pool_matmul_acc_kernel, out_shape=out_shape, grid=(nb, nc, nk),
        in_specs=[p_spec, s_spec, x_spec], out_specs=o_spec,
        scratch_shapes=[pltpu.VMEM((b_tile, out_size, c_tile), jnp.float32)],
        compiler_params=params, cost_estimate=cost)(p, s, xk)


# ----------------------------------------------------------------------------
# Jitted entry points (pool matrices fold to constants, reshapes fuse).
# ----------------------------------------------------------------------------
@functools.partial(jax.jit, static_argnums=(1,))
def _adaptive_pool_1d(x, output_size):
    # [batch, time, channels] -> [batch, output_size, channels]
    return _pool_middle_axis(x, output_size)


@functools.partial(jax.jit, static_argnums=(1, 2))
def _adaptive_pool_2d(x, oh, ow):
    # [batch, H, W, channels] -> [batch, oh, ow, channels]
    b, h, w, c = x.shape
    # bf16/f16 inputs keep a bf16/f16 intermediate (kernel is HBM-bound; the
    # extra rounding is below the final output quantization); otherwise f32.
    if jnp.dtype(x.dtype) in (jnp.dtype(jnp.bfloat16), jnp.dtype(jnp.float16)):
        mid_dtype = x.dtype
    else:
        mid_dtype = jnp.float32

    # TODO(synk): fuse both passes into one kernel to avoid the HBM round trip of
    # the intermediate (needs an in-kernel lane<->sublane relayout for general C).
    if c >= 128:
        # Both pass orders are lane-dense; shrink the bigger axis first so the
        # HBM intermediate is as small as possible.
        if oh * w <= h * ow:                               # H-first intermediate smaller
            y = _pool_middle_axis(x.reshape(b, h, w * c), oh, out_dtype=mid_dtype)
            y = _pool_middle_axis(y.reshape(b * oh, w, c), ow, out_dtype=x.dtype)
            return y.reshape(b, oh, ow, c)
        y = _pool_middle_axis(x.reshape(b * h, w, c), ow, out_dtype=mid_dtype)
        y = _pool_middle_axis(y.reshape(b, h, ow * c), oh, out_dtype=x.dtype)
        return y.reshape(b, oh, ow, c)

    # C < 128: pool H first with lane dim W*C (lane-dense).  If the shrunk
    # intermediate can present a >=128-wide lane dim for pass 2, relayout it so
    # the W pass avoids sub-128 masked loads/stores.
    y = _pool_middle_axis(x.reshape(b, h, w * c), oh, out_dtype=mid_dtype)  # (b, oh, w*c)
    if oh * c >= 128:
        y = y.reshape(b, oh, w, c).transpose(0, 2, 1, 3).reshape(b, w, oh * c)
        y = _pool_middle_axis(y, ow, out_dtype=x.dtype)                     # (b, ow, oh*c)
        return y.reshape(b, ow, oh, c).transpose(0, 2, 1, 3)
    y = _pool_middle_axis(y.reshape(b * oh, w, c), ow, out_dtype=x.dtype)
    return y.reshape(b, oh, ow, c)


# ----------------------------------------------------------------------------
# Module.
# ----------------------------------------------------------------------------
class AdaptivePool:
    """JAX/Pallas port of speechbrain.nnet.pooling.AdaptivePool (no parameters)."""

    def __init__(self, output_size):
        condition = isinstance(output_size, (int, tuple, list))
        assert condition, "output size must be int, list or tuple"
        if isinstance(output_size, (tuple, list)):
            assert len(output_size) == 2, "len of output size must not be greater than 2"
        self.output_size = output_size

    def __call__(self, x):
        if x.ndim == 3:
            if not isinstance(self.output_size, int):
                # TODO(synk): 3D input + tuple output_size hits PyTorch's unbatched
                # AdaptiveAvgPool2d path (pools over batch and time); not reproduced.
                raise NotImplementedError("3D input requires an int output_size")
            return _adaptive_pool_1d(x, int(self.output_size))

        if x.ndim == 4:
            if isinstance(self.output_size, int):
                # PyTorch would feed a 4D tensor to AdaptiveAvgPool1d and error out.
                raise ValueError("4D input requires a 2-element output_size")
            oh, ow = self.output_size
            oh = x.shape[1] if oh is None else int(oh)
            ow = x.shape[2] if ow is None else int(ow)
            return _adaptive_pool_2d(x, oh, ow)

        raise ValueError("AdaptivePool expects a 3D or 4D input")


# ----------------------------------------------------------------------------
# References + tests.
# ----------------------------------------------------------------------------
def _ref_pool1d(xn, o):
    n, l, c = xn.shape
    out = np.zeros((n, o, c), np.float32)
    for i in range(o):
        s = (i * l) // o
        e = -((-(i + 1) * l) // o)
        out[:, i, :] = xn[:, s:e, :].astype(np.float32).mean(axis=1)
    return out


def _ref_pool2d(xn, oh, ow):
    n, h, w, c = xn.shape
    out = np.zeros((n, oh, ow, c), np.float32)
    for i in range(oh):
        hs, he = (i * h) // oh, -((-(i + 1) * h) // oh)
        for j in range(ow):
            ws, we = (j * w) // ow, -((-(j + 1) * w) // ow)
            out[:, i, j, :] = xn[:, hs:he, ws:we, :].astype(np.float32).mean(axis=(1, 2))
    return out


if __name__ == "__main__":
    key = jax.random.PRNGKey(0)
    k1, k2, k3, k4, k5 = jax.random.split(key, 5)

    # ---- 3D: [batch=2, time=16, channels=8] ----
    x3 = jax.random.normal(k1, (2, 16, 8), dtype=jnp.float32)

    y1 = jax.block_until_ready(AdaptivePool(1)(x3))               # global-mean kernel
    assert y1.shape == (2, 1, 8)
    assert np.allclose(np.asarray(y1), _ref_pool1d(np.asarray(x3), 1), atol=1e-5)

    y3 = jax.block_until_ready(AdaptivePool(4)(x3))               # matmul kernel
    assert y3.shape == (2, 4, 8)
    assert np.allclose(np.asarray(y3), _ref_pool1d(np.asarray(x3), 4), atol=1e-5)

    x3b = x3.astype(jnp.bfloat16)                                 # bf16: 0/1 weights + f32 scale
    y3b = jax.block_until_ready(AdaptivePool(4)(x3b))
    assert y3b.dtype == jnp.bfloat16 and y3b.shape == (2, 4, 8)
    ref_b = _ref_pool1d(np.asarray(x3b, dtype=np.float32), 4)
    assert np.allclose(np.asarray(y3b, dtype=np.float32), ref_b, atol=2e-2)

    # ---- split-L accumulator path (forced small l_tile; exercises L padding) ----
    x3s = jax.random.normal(k3, (3, 200, 8), dtype=jnp.float32)
    y3s = jax.block_until_ready(_pool_middle_axis(x3s, 4, force_split_l=128))
    assert y3s.shape == (3, 4, 8)
    assert np.allclose(np.asarray(y3s), _ref_pool1d(np.asarray(x3s), 4), atol=1e-5)

    # ---- 4D: small channels (simple pass-2 layout) ----
    x4 = jax.random.normal(k2, (2, 8, 12, 4), dtype=jnp.float32)
    y4 = jax.block_until_ready(AdaptivePool((2, 3))(x4))
    assert y4.shape == (2, 2, 3, 4)
    assert np.allclose(np.asarray(y4), _ref_pool2d(np.asarray(x4), 2, 3), atol=1e-5)

    # ---- 4D: channels >= 128 (W-first ordering, smaller intermediate) ----
    x4w = jax.random.normal(k4, (2, 6, 8, 128), dtype=jnp.float32)
    y4w = jax.block_until_ready(AdaptivePool((3, 2))(x4w))
    assert y4w.shape == (2, 3, 2, 128)
    assert np.allclose(np.asarray(y4w), _ref_pool2d(np.asarray(x4w), 3, 2), atol=1e-5)

    # ---- 4D: channels < 128 but oh*c >= 128 (lane-dense relayout for pass 2) ----
    x4t = jax.random.normal(k5, (2, 8, 6, 64), dtype=jnp.float32)
    y4t = jax.block_until_ready(AdaptivePool((2, 3))(x4t))
    assert y4t.shape == (2, 2, 3, 64)
    assert np.allclose(np.asarray(y4t), _ref_pool2d(np.asarray(x4t), 2, 3), atol=1e-5)

    print("KERNEL_OK")
</pallas_src>

<mosaic_0001>
module attributes {stable_mosaic.version = 11 : i64} {
  func.func @_global_mean_kernel(%arg0: i32, %arg1: i32, %arg2: memref<1x16x8xf32, #tpu.memory_space<vmem>>, %arg3: memref<1x1x8xf32, #tpu.memory_space<vmem>>) attributes {dimension_semantics = [#tpu.dimension_semantics<parallel>, #tpu.dimension_semantics<parallel>], iteration_bounds = array<i64: 2, 1>, scalar_prefetch = 0 : i64, scratch_operands = 0 : i64, tpu.core_type = #tpu.core_type<tc>, window_params = [{transform_indices = @transform_0, window_bounds = array<i64: 1, 16, 8>}, {transform_indices = @transform_1, window_bounds = array<i64: 1, 1, 8>}]} {
    %c0 = arith.constant 0 : index
    %c0_0 = arith.constant 0 : index
    %c0_1 = arith.constant 0 : index
    %0 = vector.load %arg2[%c0, %c0_0, %c0_1] : memref<1x16x8xf32, #tpu.memory_space<vmem>>, vector<1x16x8xf32>
    %cst = arith.constant dense<0.000000e+00> : vector<1x8xf32>
    %1 = vector.multi_reduction <add>, %0, %cst [1] : vector<1x16x8xf32> to vector<1x8xf32>
    %2 = vector.shape_cast %1 : vector<1x8xf32> to vector<1x1x8xf32>
    %cst_2 = arith.constant 6.250000e-02 : f32
    %3 = vector.broadcast %cst_2 : f32 to vector<1x1x8xf32>
    %4 = arith.mulf %2, %3 : vector<1x1x8xf32>
    %c0_3 = arith.constant 0 : index
    %c0_4 = arith.constant 0 : index
    %c0_5 = arith.constant 0 : index
    %5 = vector.load %arg3[%c0_3, %c0_4, %c0_5] : memref<1x1x8xf32, #tpu.memory_space<vmem>>, vector<1x1x8xf32>
    tpu.vector_store %arg3[%c0_3, %c0_4, %c0_5], %4 {strides = array<i32>} : memref<1x1x8xf32, #tpu.memory_space<vmem>>, vector<1x1x8xf32>,
    return
  }
  func.func @transform_0(%arg0: i32, %arg1: i32) -> (i32, i32, i32) {
    %c0_i32 = arith.constant 0 : i32
    %c0_i32_0 = arith.constant 0 : i32
    return %arg0, %c0_i32, %arg1 : i32, i32, i32
  }
  func.func @transform_1(%arg0: i32, %arg1: i32) -> (i32, i32, i32) {
    %c0_i32 = arith.constant 0 : i32
    %c0_i32_0 = arith.constant 0 : i32
    return %arg0, %c0_i32, %arg1 : i32, i32, i32
  }
}

</mosaic_0001>

<llo_original>
// kernel: _adaptive_pool_1d.1
$region0: #{_adaptive_pool_1d.1}
  #allocation0 [shape = 'u32[]', space=smem, size = 0x4, offset = 0x4, fixed_abs, tag = 'smem constant byte address 0x4 - core index']
  #allocation1 [shape = 'u32[72,128]{1,0:T(1,128)}', space=vmem, size = 0x9000, scoped, tag = 'internal scratch']
  %s0 = inlined_call_operand.vmem [shape: f32[2,16,8], index: 0, kind: input, shape index: {}]
  %s1 = inlined_call_operand.hbm [shape: f32[2,1,8], index: 1, kind: output, shape index: {}]
  %s2 = sld [smem:[#allocation0]]
  $region37: #{_adaptive_pool_1d.1} parent=0
    _
  %s4 = ssub.s32 1, %s2
  %s5 = scalar_select 0, %s4, %s2
  $region1: #{_adaptive_pool_1d.1} parent=0
    #allocation2 [shape = 'u8[1024]{0}', space=vmem, size = 0x400, scoped, tag = 'output window, operand 0']
    #allocation3 [shape = 's32[2]{0}', space=sflag, size = 0x8, scoped, tag = 'scoped memory for _adaptive_pool_1d.1']
    %6 = vsyncpa [#allocation3], 0
    %s7 = scalar_lea.sflag [#allocation3], 1
    %8 = vsyncpa %s7, 0
    loop: start=0, step=1, limit=4
    $region2: #{_adaptive_pool_1d.1} parent=1 // loop_pre_header
      _
    $region3: #{_adaptive_pool_1d.1} parent=1 // loop_header
      %s10 = sphi 0, %s14
      %p11 = scmp.ge.s32.totalorder %s10, 4
      %s17 = sphi 0, %s29
      %s18 = sphi 0, %s25
      %s19 = sphi 0, %s17
      %s20 = sphi 0, %s18
      %s21 = sphi 0, %s19
      %s22 = sphi 0, %s20
      %s34 = sphi 0, %s36
      %s37 = sphi 0, %s34
      %s38 = sphi 0, %s37
      %s54 = sphi 0, %s38
      %s62 = sphi 0, %s64
      %s65 = sphi 0, %s62
      %s66 = sphi 0, %s65
      %s82 = sphi 0, %s66
    $region4: #{_adaptive_pool_1d.1} parent=1 // loop_header_branch
      %13 = sbr.rel (%p11) target = $region8
    $region5: #{_adaptive_pool_1d.1} parent=1 // loop_body
      %s15 = ssub.s32 %s10, 1
      %s16 = ssub.s32 %s10, 2
      %s23 = sadd.s32 1, %s18
      %p24 = scmp.ge.s32.totalorder %s23, 1
      %s25 = scalar_select %p24, 0, %s23
      %s26 = sadd.s32 1, %s17
      %s27 = scalar_select %p24, %s26, %s17
      %p28 = scmp.ge.s32.totalorder %s27, 2
      %s29 = scalar_select %p28, 0, %s27
      %s30 = ssub.s32 %s17, %s29
      %s31 = ssub.s32 %s18, %s25
      %s32 = sor.u32 %s30, %s31
      %p33 = scmp.eq.s32.totalorder %s32, 0
      %s35 = sadd.s32 %s34, 1
      %s36 = scalar_select %p33, %s34, %s35
      %p39 = pneg %p33
      %p40 = scmp.eq.s32.totalorder %s10, 1
      %p41 = por %p39, %p40
      %p42 = scmp.ne.s32.totalorder %s34, %s37
      %p43 = scmp.eq.s32.totalorder %s10, 0
      %p44 = por %p42, %p43
      %p45 = scmp.ne.s32.totalorder %s34, %s37
      %p46 = scmp.eq.s32.totalorder %s15, 1
      %p47 = por %p45, %p46
      %p48 = scmp.ne.s32.totalorder %s37, %s38
      %p49 = scmp.eq.s32.totalorder %s15, 0
      %p50 = por %p48, %p49
      %p51 = scmp.ne.s32.totalorder %s37, %s38
      %p52 = scmp.eq.s32.totalorder %s16, 1
      %p53 = por %p51, %p52
      %p55 = scmp.ne.s32.totalorder %s38, %s54
      %p56 = scmp.eq.s32.totalorder %s16, 0
      %p57 = por %p55, %p56
      %s58 = ssub.s32 %s17, %s29
      %s59 = ssub.s32 %s18, %s25
      %s60 = sor.u32 %s58, %s59
      %p61 = scmp.eq.s32.totalorder %s60, 0
      %s63 = sadd.s32 %s62, 1
      %s64 = scalar_select %p61, %s62, %s63
      %p67 = pneg %p61
      %p68 = scmp.eq.s32.totalorder %s10, 1
      %p69 = por %p67, %p68
      %p70 = scmp.ne.s32.totalorder %s62, %s65
      %p71 = scmp.eq.s32.totalorder %s10, 0
      %p72 = por %p70, %p71
      %p73 = scmp.ne.s32.totalorder %s62, %s65
      %p74 = scmp.eq.s32.totalorder %s15, 1
      %p75 = por %p73, %p74
      %p76 = scmp.ne.s32.totalorder %s65, %s66
      %p77 = scmp.eq.s32.totalorder %s15, 0
      %p78 = por %p76, %p77
      %p79 = scmp.ne.s32.totalorder %s65, %s66
      %p80 = scmp.eq.s32.totalorder %s16, 1
      %p81 = por %p79, %p80
      %p83 = scmp.ne.s32.totalorder %s66, %s82
      %p84 = scmp.eq.s32.totalorder %s16, 0
      %p85 = por %p83, %p84
      %p86 = scmp.le.s32.totalorder 1, %s10
      %p87 = scmp.lt.s32.totalorder %s10, 3
      %p88 = pnand %p86, %p87
      %p89 = pneg %p88
      // Predicated region
      $region9: #{_adaptive_pool_1d.1} parent=5 // pred_check
        _
      $region10: #{_adaptive_pool_1d.1} parent=5 // pred_check_branch
        %91 = sbr.rel (%p88) target = $region12
      $region11: #{_adaptive_pool_1d.1} parent=5 // pred_region
        %s92 = ssub.s32 %s10, 1
      $region12: #{_adaptive_pool_1d.1} parent=5 // pred_fallthru
        _
      %p93 = scmp.lt.s32.totalorder %s10, 2
      // Predicated region
      $region13: #{_adaptive_pool_1d.1} parent=5 // pred_check
        %p94 = pneg %p93
      $region14: #{_adaptive_pool_1d.1} parent=5 // pred_check_branch
        %96 = sbr.rel (%p94) target = $region16
      $region15: #{_adaptive_pool_1d.1} parent=5 // pred_region
        // Predicated region
        $region17: #{_adaptive_pool_1d.1} parent=15 // pred_check
          %p97 = pneg %p44
        $region18: #{_adaptive_pool_1d.1} parent=15 // pred_check_branch
          %99 = sbr.rel (%p97) target = $region20
        $region19: #{_adaptive_pool_1d.1} parent=15 // pred_region
          %p100 = scmp.lt.s32.totalorder %s17, 1
          %s101 = scalar_select %p100, %s17, 1
          %p102 = scmp.lt.s32.totalorder %s18, 0
          %s103 = scalar_select %p102, %s18, 0
          %s104 = smul.addr %s101, 2
          %s105 = sadd.s32 %s103, %s104
          %s106 = smul.addr %s105, 8
          %s107 = scalar_lea.vmem %s0, %s106
        $region20: #{_adaptive_pool_1d.1} parent=15 // pred_fallthru
          _
      $region16: #{_adaptive_pool_1d.1} parent=5 // pred_fallthru
        _
      %p108 = scmp.le.s32.totalorder 1, %s10
      %p109 = scmp.lt.s32.totalorder %s10, 3
      %p110 = pnand %p108, %p109
      %p111 = pneg %p110
      // Predicated region
      $region21: #{_adaptive_pool_1d.1} parent=5 // pred_check
        _
      $region22: #{_adaptive_pool_1d.1} parent=5 // pred_check_branch
        %113 = sbr.rel (%p110) target = $region24
      $region23: #{_adaptive_pool_1d.1} parent=5 // pred_region
        %s114 = ssub.s32 %s10, 1
        %p115 = scmp.lt.s32.totalorder %s19, 1
        %s116 = scalar_select %p115, %s19, 1
        %p117 = scmp.lt.s32.totalorder %s20, 0
        %s118 = scalar_select %p117, %s20, 0
        %s119 = smul.addr %s116, 2
        %s120 = sadd.s32 %s118, %s119
        %s121 = smul.addr %s120, 8
        %s122 = scalar_lea.vmem %s0, %s121
        %p123 = pneg %p50
        %p124 = pneg %p47
        %p125 = pneg %p78
        %p126 = pneg %p75
        %s127 = sand.u32 %s65, 1
        %s128 = scalar_lea.sflag [#allocation3], %s127
        %s129 = sand.u32 %s65, 1
        %s130 = scalar_lea.vmem [#allocation2], %s129
        %p131 = scmp.lt.s32.totalorder %s19, 1
        %s132 = scalar_select %p131, %s19, 1
        %p133 = scmp.lt.s32.totalorder %s20, 0
        %s134 = scalar_select %p133, %s20, 0
        %s135 = smul.addr %s132, 2
        %s136 = sadd.s32 %s134, %s135
        %s137 = smul.addr %s136, 8
        %s138 = scalar_lea.vmem %s0, %s137
        %v139 = vld [vmem:[%s138] sm:$0xff]
        %v140 = vld [vmem:[%s138 + $0x8] sm:$0xff]
        %vm141 = vcmask 64512
        %v142 = vsel %vm141, %v139, 0.0
        %v143 = vsel %vm141, %v140, 0.0
        %v144 = vadd.f32 %v142, %v143
        %v145 = vrot.slane %v144, 4
        %v146 = vadd.f32 %v144, %v145
        %v147 = vrot.slane %v146, 2
        %v148 = vadd.f32 %v146, %v147
        %v149 = vrot.slane %v148, 1
        %v150 = vadd.f32 %v148, %v149
        %v151 = vmul.f32 %v150, 0.0625
        %vm152 = vcmask 57344
        %153 = vst.msk [vmem:[%s130] sm:$0x1] %vm152, %v151
        %s154 = sand.u32 %s65, 1
        %s155 = scalar_lea.sflag [#allocation3], %s154
        %s156 = sand.u32 %s65, 1
        %s157 = scalar_lea.vmem [#allocation2], %s156
        // Predicated region
        $region25: #{_adaptive_pool_1d.1} parent=23 // pred_check
          %p158 = pneg %p75
        $region26: #{_adaptive_pool_1d.1} parent=23 // pred_check_branch
          %160 = sbr.rel (%p158) target = $region28
        $region27: #{_adaptive_pool_1d.1} parent=23 // pred_region
          %162 = vsyncadd %s155, 0
          %s163 = sadd.s32 %s20, %s19
          %s164 = scalar_lea.hbm %s1, %s163
          %s166 = sshll.u32 %s157, 4
          %s167 = int_to_ptr.vmem [resolvable:$true] %s166
          %s168 = sshll.u32 %s164, 4
          %s169 = int_to_ptr.hbm [resolvable:$true] %s168
          %171 = dma.vmem_to_hbm [thread:$0]  %s167, 16, %s169, %s155
        $region28: #{_adaptive_pool_1d.1} parent=23 // pred_fallthru
          _
      $region24: #{_adaptive_pool_1d.1} parent=5 // pred_fallthru
        _
      %p172 = scmp.le.s32.totalorder 2, %s10
      // Predicated region
      $region29: #{_adaptive_pool_1d.1} parent=5 // pred_check
        %p173 = pneg %p172
      $region30: #{_adaptive_pool_1d.1} parent=5 // pred_check_branch
        %175 = sbr.rel (%p173) target = $region32
      $region31: #{_adaptive_pool_1d.1} parent=5 // pred_region
        %s176 = ssub.s32 %s10, 2
        // Predicated region
        $region33: #{_adaptive_pool_1d.1} parent=31 // pred_check
          %p177 = pneg %p81
        $region34: #{_adaptive_pool_1d.1} parent=31 // pred_check_branch
          %179 = sbr.rel (%p177) target = $region36
        $region35: #{_adaptive_pool_1d.1} parent=31 // pred_region
          %s180 = sand.u32 %s66, 1
          %s181 = scalar_lea.sflag [#allocation3], %s180
          %s182 = sand.u32 %s66, 1
          %s183 = scalar_lea.vmem [#allocation2], %s182
          %185 = dma.done %s181, 16
        $region36: #{_adaptive_pool_1d.1} parent=31 // pred_fallthru
          _
      $region32: #{_adaptive_pool_1d.1} parent=5 // pred_fallthru
        _
    $region6: #{_adaptive_pool_1d.1} parent=1 // loop_footer
      %s14 = sadd.s32 1, %s10
    $region7: #{_adaptive_pool_1d.1} parent=1 // loop_footer_branch
      %9 = sbr.rel target = $region3
    $region8: #{_adaptive_pool_1d.1} parent=1 // loop_exit
      _
    %186 = vsyncpa [#allocation3], 1
    %s187 = scalar_lea.sflag [#allocation3], 1
    %188 = vsyncpa %s187, 1

</llo_original>
